<compile_context>
chip_gen: v6e
topology: v6e:2x2x1
jax: 0.10.0
libtpu: 0.0.40
codegen_flags: <defaults>
</compile_context>

<pallas_src>
import jax
import jax.numpy as jnp
from jax.experimental import pallas as pl
from jax.experimental.pallas import tpu as pltpu


def _dsilu_kernel(x_ref, o_ref):
    x = x_ref[...].astype(jnp.float32)
    sig = jax.nn.sigmoid(x)
    # dSiLU(x) = sigmoid(x) * (1 + x * (1 - sigmoid(x)))
    o_ref[...] = (sig * (1.0 + x * (1.0 - sig))).astype(o_ref.dtype)


_LANE = 128
_ROW_ALIGN = 32                  # keep bf16/int8/fp8 native (16/32,128) packing
_TARGET_BLOCK_BYTES = 4 << 20    # one in-block + one out-block combined


def _dsilu_2d(x2d, out_dtype):
    """Run the elementwise kernel on a lane-dense (rows, lanes) slab."""
    rows, lanes = x2d.shape
    bytes_per_row = lanes * (x2d.dtype.itemsize + jnp.dtype(out_dtype).itemsize)
    target_rows = max(
        _ROW_ALIGN,
        (_TARGET_BLOCK_BYTES // bytes_per_row) // _ROW_ALIGN * _ROW_ALIGN,
    )

    if rows <= 2 * _ROW_ALIGN:
        # Tiny input: single full-extent block (exempt from the (8,128) rule).
        tile_rows = rows
        grid_n = 1
    else:
        # Even grid so both v7x TensorCores get balanced work (no-op on v5e/v6e).
        grid_n = max(2, pl.cdiv(rows, target_rows))
        if grid_n % 2:
            grid_n += 1
        tile_rows = pl.cdiv(rows, grid_n)
        tile_rows = ((tile_rows + _ROW_ALIGN - 1) // _ROW_ALIGN) * _ROW_ALIGN
        grid_n = pl.cdiv(rows, tile_rows)   # partial last block is masked by Pallas

    return pl.pallas_call(
        _dsilu_kernel,
        out_shape=jax.ShapeDtypeStruct((rows, lanes), out_dtype),
        grid=(grid_n,),
        in_specs=[pl.BlockSpec((tile_rows, lanes), lambda i: (i, 0))],
        out_specs=pl.BlockSpec((tile_rows, lanes), lambda i: (i, 0)),
        compiler_params=pltpu.CompilerParams(
            dimension_semantics=("parallel",),
            vmem_limit_bytes=32 << 20,
        ),
    )(x2d)


def dsilu(x, out_dtype=None):
    """Elementwise dSiLU over any shape.

    out_dtype defaults to promote_types(x.dtype, float32) (matches the PyTorch
    `.float()` spec).  bf16/f16 callers that accept same-dtype output can pass
    out_dtype=x.dtype to cut HBM write traffic.
    """
    if out_dtype is None:
        out_dtype = jnp.promote_types(x.dtype, jnp.float32)
    out_dtype = jnp.dtype(out_dtype)
    orig_shape = x.shape
    n = x.size
    if n == 0:
        return jnp.zeros(orig_shape, out_dtype)

    flat = x.reshape(-1)
    tail = n % _LANE
    bulk = n - tail

    # Widest lane-dense trailing width dividing the lane-aligned bulk so the
    # reshape is a free contiguous view.
    lanes = _LANE
    for w in (1024, 512, 256):
        if bulk % w == 0:
            lanes = w
            break

    pieces = []
    if bulk:
        out_bulk = _dsilu_2d(flat[:bulk].reshape(bulk // lanes, lanes), out_dtype)
        pieces.append(out_bulk.reshape(-1))
    if tail:
        # <128-element ragged tail: tiny padded second call (negligible traffic).
        tail_in = jnp.pad(flat[bulk:], (0, _LANE - tail)).reshape(1, _LANE)
        out_tail = _dsilu_2d(tail_in, out_dtype).reshape(-1)[:tail]
        pieces.append(out_tail)

    # TODO(synk): for ragged sizes the concatenate re-copies the bulk output;
    # removable with an aliased write-back or in-kernel masked tail tile.
    out = pieces[0] if len(pieces) == 1 else jnp.concatenate(pieces)
    return out.reshape(orig_shape)


def dsilu_ref(x):
    xf = x.astype(jnp.float32)
    sig = jax.nn.sigmoid(xf)
    return sig * (1.0 + xf * (1.0 - sig))


if __name__ == "__main__":
    key = jax.random.PRNGKey(0)
    x = jax.random.normal(key, (2, 4, 16, 16), dtype=jnp.float32)  # NCHW

    out = dsilu(x)
    jax.block_until_ready(out)

    ref = dsilu_ref(x)
    assert out.shape == x.shape and out.dtype == ref.dtype
    assert jnp.allclose(out, ref, atol=1e-6, rtol=1e-6)
    print("KERNEL_OK")
</pallas_src>

<mosaic_0001>
module attributes {stable_mosaic.version = 11 : i64} {
  func.func @_dsilu_kernel(%arg0: i32, %arg1: memref<2x1024xf32, #tpu.memory_space<vmem>>, %arg2: memref<2x1024xf32, #tpu.memory_space<vmem>>) attributes {dimension_semantics = [#tpu.dimension_semantics<parallel>], iteration_bounds = array<i64: 1>, scalar_prefetch = 0 : i64, scratch_operands = 0 : i64, tpu.core_type = #tpu.core_type<tc>, window_params = [{transform_indices = @transform_0, window_bounds = array<i64: 2, 1024>}, {transform_indices = @transform_1, window_bounds = array<i64: 2, 1024>}]} {
    %c0 = arith.constant 0 : index
    %c0_0 = arith.constant 0 : index
    %0 = vector.load %arg1[%c0, %c0_0] : memref<2x1024xf32, #tpu.memory_space<vmem>>, vector<2x1024xf32>
    %1 = arith.negf %0 : vector<2x1024xf32>
    %2 = math.exp %1 : vector<2x1024xf32>
    %cst = arith.constant 1.000000e+00 : f32
    %3 = vector.broadcast %cst : f32 to vector<2x1024xf32>
    %4 = arith.addf %3, %2 : vector<2x1024xf32>
    %5 = arith.divf %3, %4 : vector<2x1024xf32>
    %cst_1 = arith.constant 1.000000e+00 : f32
    %6 = vector.broadcast %cst_1 : f32 to vector<2x1024xf32>
    %7 = arith.subf %6, %5 : vector<2x1024xf32>
    %8 = arith.mulf %0, %7 : vector<2x1024xf32>
    %cst_2 = arith.constant 1.000000e+00 : f32
    %9 = vector.broadcast %cst_2 : f32 to vector<2x1024xf32>
    %10 = arith.addf %9, %8 : vector<2x1024xf32>
    %11 = arith.mulf %5, %10 : vector<2x1024xf32>
    %c0_3 = arith.constant 0 : index
    %c0_4 = arith.constant 0 : index
    %12 = vector.load %arg2[%c0_3, %c0_4] : memref<2x1024xf32, #tpu.memory_space<vmem>>, vector<2x1024xf32>
    tpu.vector_store %arg2[%c0_3, %c0_4], %11 {strides = array<i32>} : memref<2x1024xf32, #tpu.memory_space<vmem>>, vector<2x1024xf32>,
    return
  }
  func.func @transform_0(%arg0: i32) -> (i32, i32) {
    %c0_i32 = arith.constant 0 : i32
    %c0_i32_0 = arith.constant 0 : i32
    return %arg0, %c0_i32 : i32, i32
  }
  func.func @transform_1(%arg0: i32) -> (i32, i32) {
    %c0_i32 = arith.constant 0 : i32
    %c0_i32_0 = arith.constant 0 : i32
    return %arg0, %c0_i32 : i32, i32
  }
}

</mosaic_0001>

<llo_original>
// kernel: tpu_custom_call.1
$region0: #{tpu_custom_call.1}
  #allocation0 [shape = 'u32[]', space=smem, size = 0x4, offset = 0x4, fixed_abs, tag = 'smem constant byte address 0x4 - core index']
  #allocation1 [shape = 'u32[144,128]{1,0:T(1,128)}', space=vmem, size = 0x12000, scoped, tag = 'internal scratch']
  %s0 = inlined_call_operand.hbm [shape: f32[2,1024], index: 0, kind: input, shape index: {}]
  %s1 = inlined_call_operand.hbm [shape: f32[2,1024], index: 1, kind: output, shape index: {}]
  %s2 = sld [smem:[#allocation0]]
  $region18: #{tpu_custom_call.1} parent=0
    _
  %s4 = ssub.s32 1, %s2
  %s5 = scalar_select 0, %s4, %s2
  $region1: #{tpu_custom_call.1} parent=0
    #allocation2 [shape = 'u8[8192]{0}', space=vmem, size = 0x2000, scoped, tag = 'input window, operand 0, single buffered']
    #allocation3 [shape = 's32[1]{0}', space=sflag, size = 0x4, scoped, tag = 'scoped memory for tpu_custom_call.1']
    #allocation4 [shape = 's32[1]{0}', space=sflag, size = 0x4, scoped, tag = 'scoped memory for tpu_custom_call.1']
    #allocation5 [shape = 'u8[8192]{0}', space=vmem, size = 0x2000, scoped, tag = 'output window, operand 0, single buffered']
    %6 = vsyncpa [#allocation3], 0
    %7 = vsyncpa [#allocation4], 0
    // Predicated region
    $region2: #{tpu_custom_call.1} parent=1 // pred_check
      _
    $region3: #{tpu_custom_call.1} parent=1 // pred_check_branch
      %9 = sbr.rel (0) target = $region5
    $region4: #{tpu_custom_call.1} parent=1 // pred_region
      %s11 = ssub.s32 256, 256
      %12 = vsyncadd [#allocation3], %s11
      %s14 = sshll.u32 [#allocation2], 4
      %s15 = int_to_ptr.vmem [resolvable:$true] %s14
      %17 = dma.hbm_to_vmem [thread:$0]  %s0, 256, %s15, [#allocation3]
    $region5: #{tpu_custom_call.1} parent=1 // pred_fallthru
      _
    // Predicated region
    $region6: #{tpu_custom_call.1} parent=1 // pred_check
      _
    $region7: #{tpu_custom_call.1} parent=1 // pred_check_branch
      %19 = sbr.rel (0) target = $region9
    $region8: #{tpu_custom_call.1} parent=1 // pred_region
      %20 = dma.done [#allocation3], 256
    $region9: #{tpu_custom_call.1} parent=1 // pred_fallthru
      _
    %v21 = vld [vmem:[#allocation2] sm:$0xff]
    %v22 = vld [vmem:[#allocation2 + $0x8] sm:$0xff]
    %v23 = vxor.u32 %v21, 2147483648
    %v24 = vxor.u32 %v22, 2147483648
    %v25 = vmul.f32 %v23, 1.442695
    %v26 = vpow.pop %v25
    %v27 = vmul.f32 %v24, 1.442695
    %v28 = vpow.pop %v27
    %v29 = vadd.f32 %v26, 1.0
    %v30 = vadd.f32 %v28, 1.0
    %v31 = vrcp.pop %v29
    %v32 = vmul.f32 1.0, %v31
    %v33 = vrcp.pop %v30
    %v34 = vmul.f32 1.0, %v33
    %v35 = vsub.f32 1.0, %v32
    %v36 = vsub.f32 1.0, %v34
    %v37 = vmul.f32 %v21, %v35
    %v38 = vmul.f32 %v22, %v36
    %v39 = vadd.f32 %v37, 1.0
    %v40 = vadd.f32 %v38, 1.0
    %v41 = vmul.f32 %v32, %v39
    %v42 = vmul.f32 %v34, %v40
    %43 = vst [vmem:[#allocation5] sm:$0xff] %v41
    %44 = vst [vmem:[#allocation5 + $0x8] sm:$0xff] %v42
    // Predicated region
    $region10: #{tpu_custom_call.1} parent=1 // pred_check
      _
    $region11: #{tpu_custom_call.1} parent=1 // pred_check_branch
      %46 = sbr.rel (0) target = $region13
    $region12: #{tpu_custom_call.1} parent=1 // pred_region
      %s48 = ssub.s32 256, 256
      %49 = vsyncadd [#allocation4], %s48
      %s51 = sshll.u32 [#allocation5], 4
      %s52 = int_to_ptr.vmem [resolvable:$true] %s51
      %54 = dma.vmem_to_hbm [thread:$0]  %s52, 256, %s1, [#allocation4]
    $region13: #{tpu_custom_call.1} parent=1 // pred_fallthru
      _
    // Predicated region
    $region14: #{tpu_custom_call.1} parent=1 // pred_check
      _
    $region15: #{tpu_custom_call.1} parent=1 // pred_check_branch
      %56 = sbr.rel (0) target = $region17
    $region16: #{tpu_custom_call.1} parent=1 // pred_region
      %57 = dma.done [#allocation4], 256
    $region17: #{tpu_custom_call.1} parent=1 // pred_fallthru
      _
    %58 = vsyncpa [#allocation3], 1
    %59 = vsyncpa [#allocation4], 1

</llo_original>
